<compile_context>
chip_gen: v5e
topology: v5e:2x2
jax: 0.10.0
libtpu: 0.0.40
codegen_flags: <defaults>
</compile_context>

<pallas_src>
import jax
import jax.numpy as jnp
from jax.experimental import pallas as pl
from jax.experimental.pallas import tpu as pltpu

NUM_ACTIONS = 2
HIDDEN = 128
OUT_COLS = NUM_ACTIONS + 1  # [p0, p1, value]


def _round_up(n, m):
    return ((n + m - 1) // m) * m


def policy_kernel(x_ref, w_ref, b_ref, out_ref):
    x = x_ref[...]                                                 # (TB, 128) f32

    # Single fused matmul for both heads: y[:, :2] = action scores, y[:, 2] = value.
    y = jnp.dot(x, w_ref[...],
                preferred_element_type=jnp.float32) + b_ref[...]   # (TB, 3)

    s0 = y[:, 0:1]
    s1 = y[:, 1:2]

    # 2-class softmax == sigmoid of the logit difference (numerically stable:
    # exponentiate only non-positive arguments).
    d = s0 - s1
    ed = jnp.exp(-jnp.abs(d))                                      # EUP
    p_big = pl.reciprocal(1.0 + ed, approx=False)                  # prob of larger logit
    p0 = jnp.where(d >= 0, p_big, 1.0 - p_big)

    out_ref[:, 0:1] = p0
    out_ref[:, 1:2] = 1.0 - p0
    out_ref[:, 2:3] = y[:, 2:3]


def policy_nn_forward(x, wa, ba, wv, bv, *, tb=2048):
    """x: (B, 128) f32. Returns (softmax probs (B, 2), state values (B, 1))."""
    B = x.shape[0]

    # Fuse both heads into one weight/bias so the kernel needs a single matmul.
    w = jnp.concatenate([wa, wv], axis=1)                          # (128, 3)
    b = jnp.concatenate([ba, bv], axis=1)                          # (1, 3)

    # Batch tile: multiple of 8 (sublane rule); <= tb so the double-buffered x
    # tile (2 * tb * 128 * 4 B) stays well inside every generation's scoped VMEM.
    tb = min(tb, _round_up(B, 8))
    b_pad = _round_up(B, tb)
    if b_pad != B:
        x = jnp.pad(x, ((0, b_pad - B), (0, 0)))

    grid = (b_pad // tb,)

    out = pl.pallas_call(
        policy_kernel,
        out_shape=jax.ShapeDtypeStruct((b_pad, OUT_COLS), jnp.float32),
        grid=grid,
        in_specs=[
            pl.BlockSpec((tb, HIDDEN), lambda i: (i, 0)),          # x: streamed per tile
            pl.BlockSpec((HIDDEN, OUT_COLS), lambda i: (0, 0)),    # fused W: VMEM-resident
            pl.BlockSpec((1, OUT_COLS), lambda i: (0, 0)),         # fused b: VMEM-resident
        ],
        out_specs=pl.BlockSpec((tb, OUT_COLS), lambda i: (i, 0)),  # merged (probs || value)
        compiler_params=pltpu.CompilerParams(
            dimension_semantics=("parallel",),                     # megacore split on v7x
        ),
        cost_estimate=pl.CostEstimate(
            flops=2 * b_pad * HIDDEN * OUT_COLS,
            transcendentals=b_pad,
            bytes_accessed=(b_pad * HIDDEN * 4            # x read
                            + HIDDEN * OUT_COLS * 4       # fused weight
                            + OUT_COLS * 4                # fused bias
                            + b_pad * OUT_COLS * 4),      # merged output write
        ),
    )(x, w, b)

    return out[:B, :NUM_ACTIONS], out[:B, NUM_ACTIONS:]


def init_params(key):
    """Deterministic init mimicking torch nn.Linear default: U(-1/sqrt(in), 1/sqrt(in))."""
    k1, k2, k3, k4 = jax.random.split(key, 4)
    bound = 1.0 / jnp.sqrt(jnp.float32(HIDDEN))
    wa = jax.random.uniform(k1, (HIDDEN, NUM_ACTIONS), jnp.float32, -bound, bound)
    ba = jax.random.uniform(k2, (1, NUM_ACTIONS), jnp.float32, -bound, bound)
    wv = jax.random.uniform(k3, (HIDDEN, 1), jnp.float32, -bound, bound)
    bv = jax.random.uniform(k4, (1, 1), jnp.float32, -bound, bound)
    return wa, ba, wv, bv


def _reference(x, wa, ba, wv, bv):
    scores = x @ wa + ba
    return jax.nn.softmax(scores, axis=-1), x @ wv + bv


if __name__ == "__main__":
    key = jax.random.PRNGKey(0)
    k_params, k_x1, k_x2 = jax.random.split(key, 3)

    wa, ba, wv, bv = init_params(k_params)

    # --- small batch, single grid point ---
    B = 8
    x = jax.random.normal(k_x1, (B, HIDDEN), dtype=jnp.float32)
    probs, values = policy_nn_forward(x, wa, ba, wv, bv)
    probs = jax.block_until_ready(probs)
    values = jax.block_until_ready(values)

    probs_ref, values_ref = _reference(x, wa, ba, wv, bv)
    assert probs.shape == (B, NUM_ACTIONS) and values.shape == (B, 1)
    assert jnp.allclose(probs, probs_ref, atol=1e-5), "softmax(action_head) mismatch"
    assert jnp.allclose(values, values_ref, atol=1e-5), "value_head mismatch"

    # --- larger batch exercising the batch grid (grid > 1) and padding path ---
    B2 = 300
    x2 = jax.random.normal(k_x2, (B2, HIDDEN), dtype=jnp.float32)
    probs2, values2 = policy_nn_forward(x2, wa, ba, wv, bv, tb=128)
    probs2 = jax.block_until_ready(probs2)
    values2 = jax.block_until_ready(values2)

    probs2_ref, values2_ref = _reference(x2, wa, ba, wv, bv)
    assert probs2.shape == (B2, NUM_ACTIONS) and values2.shape == (B2, 1)
    assert jnp.allclose(probs2, probs2_ref, atol=1e-5), "tiled softmax mismatch"
    assert jnp.allclose(values2, values2_ref, atol=1e-5), "tiled value mismatch"

    print("KERNEL_OK")
</pallas_src>

<mosaic_0001>
module attributes {stable_mosaic.version = 11 : i64} {
  func.func @policy_kernel(%arg0: i32, %arg1: memref<8x128xf32, #tpu.memory_space<vmem>>, %arg2: memref<128x3xf32, #tpu.memory_space<vmem>>, %arg3: memref<1x3xf32, #tpu.memory_space<vmem>>, %arg4: memref<8x3xf32, #tpu.memory_space<vmem>>) attributes {dimension_semantics = [#tpu.dimension_semantics<parallel>], iteration_bounds = array<i64: 1>, scalar_prefetch = 0 : i64, scratch_operands = 0 : i64, tpu.core_type = #tpu.core_type<tc>, window_params = [{transform_indices = @transform_0, window_bounds = array<i64: 8, 128>}, {pipeline_mode = #tpu.pipeline_mode<synchronous>, transform_indices = @transform_1, window_bounds = array<i64: 128, 3>}, {pipeline_mode = #tpu.pipeline_mode<synchronous>, transform_indices = @transform_2, window_bounds = array<i64: 1, 3>}, {transform_indices = @transform_3, window_bounds = array<i64: 8, 3>}]} {
    %c0 = arith.constant 0 : index
    %c0_0 = arith.constant 0 : index
    %0 = vector.load %arg1[%c0, %c0_0] : memref<8x128xf32, #tpu.memory_space<vmem>>, vector<8x128xf32>
    %c0_1 = arith.constant 0 : index
    %c0_2 = arith.constant 0 : index
    %1 = vector.load %arg2[%c0_1, %c0_2] : memref<128x3xf32, #tpu.memory_space<vmem>>, vector<128x3xf32>
    %cst = arith.constant dense<0.000000e+00> : vector<8x3xf32>
    %2 = tpu.matmul %0, %1, %cst {dimension_numbers = #tpu.dot_dimension_numbers<[1], [0], [0], [1], [0, 0, 1, 1], [], []>} : vector<8x128xf32>, vector<128x3xf32>, vector<8x3xf32> -> vector<8x3xf32>
    %c0_3 = arith.constant 0 : index
    %c0_4 = arith.constant 0 : index
    %3 = vector.load %arg3[%c0_3, %c0_4] : memref<1x3xf32, #tpu.memory_space<vmem>>, vector<1x3xf32>
    %4 = vector.broadcast %3 : vector<1x3xf32> to vector<8x3xf32>
    %5 = arith.addf %2, %4 : vector<8x3xf32>
    %6 = vector.extract_strided_slice %5 {offsets = [0, 0], sizes = [8, 1], strides = [1, 1]} : vector<8x3xf32> to vector<8x1xf32>
    %7 = vector.extract_strided_slice %5 {offsets = [0, 1], sizes = [8, 1], strides = [1, 1]} : vector<8x3xf32> to vector<8x1xf32>
    %8 = arith.subf %6, %7 : vector<8x1xf32>
    %9 = math.absf %8 : vector<8x1xf32>
    %cst_5 = arith.constant 0.000000e+00 : f32
    %10 = vector.broadcast %cst_5 : f32 to vector<8x1xf32>
    %11 = arith.subf %10, %9 : vector<8x1xf32>
    %12 = math.exp %11 : vector<8x1xf32>
    %cst_6 = arith.constant 1.000000e+00 : f32
    %13 = vector.broadcast %cst_6 : f32 to vector<8x1xf32>
    %14 = arith.addf %13, %12 : vector<8x1xf32>
    %15 = tpu.reciprocal %14 : vector<8x1xf32> -> vector<8x1xf32>
    %cst_7 = arith.constant 0.000000e+00 : f32
    %16 = vector.broadcast %cst_7 : f32 to vector<8x1xf32>
    %17 = arith.cmpf oge, %8, %16 : vector<8x1xf32>
    %cst_8 = arith.constant 1.000000e+00 : f32
    %18 = vector.broadcast %cst_8 : f32 to vector<8x1xf32>
    %19 = arith.subf %18, %15 : vector<8x1xf32>
    %20 = arith.select %17, %15, %19 : vector<8x1xi1>, vector<8x1xf32>
    %c0_9 = arith.constant 0 : index
    %c0_10 = arith.constant 0 : index
    %21 = vector.load %arg4[%c0_9, %c0_10] : memref<8x3xf32, #tpu.memory_space<vmem>>, vector<8x1xf32>
    tpu.vector_store %arg4[%c0_9, %c0_10], %20 {strides = array<i32>} : memref<8x3xf32, #tpu.memory_space<vmem>>, vector<8x1xf32>,
    %cst_11 = arith.constant 1.000000e+00 : f32
    %22 = vector.broadcast %cst_11 : f32 to vector<8x1xf32>
    %23 = arith.subf %22, %20 : vector<8x1xf32>
    %c0_12 = arith.constant 0 : index
    %c1 = arith.constant 1 : index
    %24 = vector.load %arg4[%c0_12, %c1] : memref<8x3xf32, #tpu.memory_space<vmem>>, vector<8x1xf32>
    tpu.vector_store %arg4[%c0_12, %c1], %23 {strides = array<i32>} : memref<8x3xf32, #tpu.memory_space<vmem>>, vector<8x1xf32>,
    %25 = vector.extract_strided_slice %5 {offsets = [0, 2], sizes = [8, 1], strides = [1, 1]} : vector<8x3xf32> to vector<8x1xf32>
    %c0_13 = arith.constant 0 : index
    %c2 = arith.constant 2 : index
    %26 = vector.load %arg4[%c0_13, %c2] : memref<8x3xf32, #tpu.memory_space<vmem>>, vector<8x1xf32>
    tpu.vector_store %arg4[%c0_13, %c2], %25 {strides = array<i32>} : memref<8x3xf32, #tpu.memory_space<vmem>>, vector<8x1xf32>,
    return
  }
  func.func @transform_0(%arg0: i32) -> (i32, i32) {
    %c0_i32 = arith.constant 0 : i32
    %c0_i32_0 = arith.constant 0 : i32
    return %arg0, %c0_i32 : i32, i32
  }
  func.func @transform_1(%arg0: i32) -> (i32, i32) {
    %c0_i32 = arith.constant 0 : i32
    %c0_i32_0 = arith.constant 0 : i32
    %c0_i32_1 = arith.constant 0 : i32
    return %c0_i32, %c0_i32_0 : i32, i32
  }
  func.func @transform_2(%arg0: i32) -> (i32, i32) {
    %c0_i32 = arith.constant 0 : i32
    %c0_i32_0 = arith.constant 0 : i32
    %c0_i32_1 = arith.constant 0 : i32
    return %c0_i32, %c0_i32_0 : i32, i32
  }
  func.func @transform_3(%arg0: i32) -> (i32, i32) {
    %c0_i32 = arith.constant 0 : i32
    %c0_i32_0 = arith.constant 0 : i32
    return %arg0, %c0_i32 : i32, i32
  }
}

</mosaic_0001>

<llo_original>
// kernel: tpu_custom_call.1
$region0: #{tpu_custom_call.1}
  #allocation0 [shape = 'u32[]', space=smem, size = 0x4, offset = 0x4, fixed_abs, tag = 'smem constant byte address 0x4 - core index']
  #allocation1 [shape = 'u32[72,128]{1,0:T(1,128)}', space=vmem, size = 0x9000, scoped, tag = 'internal scratch']
  %s0 = inlined_call_operand.vmem [shape: f32[8,128], index: 0, kind: input, shape index: {}]
  %s1 = inlined_call_operand.vmem [shape: f32[128,3], index: 1, kind: input, shape index: {}]
  %s2 = inlined_call_operand.vmem [shape: f32[1,3], index: 2, kind: input, shape index: {}]
  %s3 = inlined_call_operand.vmem [shape: f32[8,3], index: 3, kind: output, shape index: {}]
  %s4 = sld [smem:[#allocation0]]
  $region22: #{tpu_custom_call.1} parent=0
    _
  %s6 = ssub.s32 1, %s4
  %s7 = scalar_select 0, %s6, %s4
  // Predicated region
  $region2: #{tpu_custom_call.1} parent=0 // pred_check
    _
  $region3: #{tpu_custom_call.1} parent=0 // pred_check_branch
    %9 = sbr.rel (0) target = $region5
  $region4: #{tpu_custom_call.1} parent=0 // pred_region
    _
  $region5: #{tpu_custom_call.1} parent=0 // pred_fallthru
    _
  // Predicated region
  $region6: #{tpu_custom_call.1} parent=0 // pred_check
    _
  $region7: #{tpu_custom_call.1} parent=0 // pred_check_branch
    %11 = sbr.rel (0) target = $region9
  $region8: #{tpu_custom_call.1} parent=0 // pred_region
    _
  $region9: #{tpu_custom_call.1} parent=0 // pred_fallthru
    _
  // Predicated region
  $region10: #{tpu_custom_call.1} parent=0 // pred_check
    _
  $region11: #{tpu_custom_call.1} parent=0 // pred_check_branch
    %13 = sbr.rel (0) target = $region13
  $region12: #{tpu_custom_call.1} parent=0 // pred_region
    _
  $region13: #{tpu_custom_call.1} parent=0 // pred_fallthru
    _
  %v14 = vld [vmem:[%s0] sm:$0xff]
  %v15 = vld [vmem:[%s1] sm:$0xff]
  %v16 = vld [vmem:[%s1 + $0x8] sm:$0xff]
  %v17 = vld [vmem:[%s1 + $0x10] sm:$0xff]
  %v18 = vld [vmem:[%s1 + $0x18] sm:$0xff]
  %v19 = vld [vmem:[%s1 + $0x20] sm:$0xff]
  %v20 = vld [vmem:[%s1 + $0x28] sm:$0xff]
  %v21 = vld [vmem:[%s1 + $0x30] sm:$0xff]
  %v22 = vld [vmem:[%s1 + $0x38] sm:$0xff]
  %v23 = vld [vmem:[%s1 + $0x40] sm:$0xff]
  %v24 = vld [vmem:[%s1 + $0x48] sm:$0xff]
  %v25 = vld [vmem:[%s1 + $0x50] sm:$0xff]
  %v26 = vld [vmem:[%s1 + $0x58] sm:$0xff]
  %v27 = vld [vmem:[%s1 + $0x60] sm:$0xff]
  %v28 = vld [vmem:[%s1 + $0x68] sm:$0xff]
  %v29 = vld [vmem:[%s1 + $0x70] sm:$0xff]
  %v30 = vld [vmem:[%s1 + $0x78] sm:$0xff]
  %v31 = vld [vmem:[%s2] sm:$0x1]
  %v33 = vperm.slane %v31, 0
  %35 = vmatpush.msra.mxu0 %v30
  %36 = vmatpush.msra.mxu0 %v29
  %37 = vmatpush.msra.mxu0 %v28
  %38 = vmatpush.msra.mxu0 %v27
  %39 = vmatpush.msra.mxu0 %v26
  %40 = vmatpush.msra.mxu0 %v25
  %41 = vmatpush.msra.mxu0 %v24
  %42 = vmatpush.msra.mxu0 %v23
  %43 = vmatpush.msra.mxu0 %v22
  %44 = vmatpush.msra.mxu0 %v21
  %45 = vmatpush.msra.mxu0 %v20
  %46 = vmatpush.msra.mxu0 %v19
  %47 = vmatpush.msra.mxu0 %v18
  %48 = vmatpush.msra.mxu0 %v17
  %49 = vmatpush.msra.mxu0 %v16
  %50 = vmatpush.msra.mxu0 %v15
  %51 = vmatmul.f32.gmra.mxu0 %v14
  %v52 = vpop.f32.mrf.mxu0
  %v53 = vadd.f32 %v33, %v52
  %54 = vdwg.mxu0
  %56 = vrot.lane.b32.xlu0 %v53, 127
  %v57 = vpop.permute.xlu0 %56
  %v59 = vsub.f32 %v53, %v57
  %v60 = vand.u32 2147483647, %v59
  %v61 = vsub.f32 0.0, %v60
  %v62 = vmul.f32 %v61, 1.442695
  %v63 = vpow.pop %v62
  %v64 = vadd.f32 %v63, 1.0
  %v65 = vrcp.pop %v64
  %v66 = vmul.f32 %v64, %v65
  %v67 = vsub.f32 1.0, %v66
  %v68 = vmul.f32 %v65, %v67
  %v69 = vadd.f32 %v65, %v68
  %vm70 = vweird.f32 %v64
  %vm71 = vweird.f32 %v65
  %vm72 = vmor %vm70, %vm71
  %v73 = vsel %vm72, %v65, %v69
  %v74 = vand.u32 2147483647, %v64
  %vm75 = vcmp.eq.f32.partialorder %v74, 8.507059e+37
  %v76 = vand.u32 %v64, 2147483648
  %v77 = vor.u32 1.1754944e-38, %v76
  %v78 = vsel %vm75, %v77, %v73
  %vm79 = vcmp.ge.f32.partialorder %v59, 0.0
  %v80 = vsub.f32 1.0, %v78
  %v81 = vsel %vm79, %v78, %v80
  %vm82 = vcmask 7168
  %83 = vst.msk [vmem:[%s3] sm:$0xff] %vm82, %v81
  %v84 = vsub.f32 1.0, %v81
  %86 = vrot.lane.b32.xlu0 %v84, 1
  %v87 = vpop.permute.xlu0 %86
  %vm89 = vcmask 15368
  %90 = vst.msk [vmem:[%s3] sm:$0xff] %vm89, %v87
  %vm91 = vcmask 23568
  %92 = vst.msk [vmem:[%s3] sm:$0xff] %vm91, %v53
  // Predicated region
  $region14: #{tpu_custom_call.1} parent=0 // pred_check
    _
  $region15: #{tpu_custom_call.1} parent=0 // pred_check_branch
    %94 = sbr.rel (0) target = $region17
  $region16: #{tpu_custom_call.1} parent=0 // pred_region
    _
  $region17: #{tpu_custom_call.1} parent=0 // pred_fallthru
    _
  // Predicated region
  $region18: #{tpu_custom_call.1} parent=0 // pred_check
    _
  $region19: #{tpu_custom_call.1} parent=0 // pred_check_branch
    %96 = sbr.rel (0) target = $region21
  $region20: #{tpu_custom_call.1} parent=0 // pred_region
    _
  $region21: #{tpu_custom_call.1} parent=0 // pred_fallthru
    _

</llo_original>
